<compile_context>
chip_gen: v5e
topology: v5e:2x2
jax: 0.10.0
libtpu: 0.0.40
codegen_flags: <defaults>
</compile_context>

<pallas_src>
import functools

import jax
import jax.numpy as jnp
from jax import lax
from jax.experimental import pallas as pl
from jax.experimental.pallas import tpu as pltpu


# Contract dim D (axis 1) of both (TILE, D) operands -> "A @ B^T" without a transpose.
_DN = (((1,), (1,)), ((), ()))


def _activate(lgt, gdc):
    if gdc == "inner":
        return jax.nn.sigmoid(lgt)
    if gdc == "bp":
        return 1.0 - jnp.exp(-jnp.exp(jnp.minimum(lgt, 25.0)))
    raise ValueError(f"unknown decoder_type {gdc!r}")


# --------------------------------------------------------------------------- #
# Kernels
# --------------------------------------------------------------------------- #
def _adj_same_kernel(z_ref, adj_ref, *, gdc, tile):
    # z_ref: (N_pad, D) bf16 slab (squeezed batch dim), resident across the whole
    #        (i, j) tile loop of a batch element (single HBM read of z per batch).
    # adj_ref: (1, TILE, TILE) output tile for grid point (b, i, j).
    i = pl.program_id(1)
    j = pl.program_id(2)
    zi = z_ref[pl.ds(pl.multiple_of(i * tile, tile), tile), :]
    zj = z_ref[pl.ds(pl.multiple_of(j * tile, tile), tile), :]
    lgt = lax.dot_general(zi, zj, _DN, preferred_element_type=jnp.float32)
    adj_ref[0] = _activate(lgt, gdc).astype(adj_ref.dtype)


def _adj_pair_kernel(z1_ref, z2_ref, adj_ref, *, gdc):
    # z1_ref: (1, TILE, D), z2_ref: (1, TILE, D) bf16 tiles; adj_ref: (1, TILE, TILE).
    lgt = lax.dot_general(z1_ref[0], z2_ref[0], _DN,
                          preferred_element_type=jnp.float32)
    adj_ref[0] = _activate(lgt, gdc).astype(adj_ref.dtype)


def _adj_pair_mean_kernel(z1_ref, z2_ref, adj_ref, acc_ref, *, gdc, inv_b):
    # Eval path: batch is the innermost ("arbitrary") grid axis; accumulate the
    # activated tile in f32 scratch and write mean once on the last batch step.
    b = pl.program_id(2)

    @pl.when(b == 0)
    def _():
        acc_ref[...] = jnp.zeros_like(acc_ref)

    lgt = lax.dot_general(z1_ref[0], z2_ref[0], _DN,
                          preferred_element_type=jnp.float32)
    acc_ref[...] += _activate(lgt, gdc)

    @pl.when(b == pl.num_programs(2) - 1)
    def _():
        adj_ref[0] = (acc_ref[...] * inv_b).astype(adj_ref.dtype)


# --------------------------------------------------------------------------- #
# pallas_call wrappers
# --------------------------------------------------------------------------- #
def _round_up(x, m):
    return (x + m - 1) // m * m


def _pick_tile(n_pad):
    # Largest tile <= 512 (fits all generations' scoped VMEM comfortably, incl.
    # v5e's 16 MiB and v7x's 64 MiB physical) that is a multiple of 128 and
    # divides the padded node count exactly.
    for t in (512, 384, 256, 128):
        if n_pad >= t and n_pad % t == 0:
            return t
    return 128


def _pad_nodes(z, n_pad):
    n = z.shape[1]
    if n_pad == n:
        return z
    return jnp.pad(z, ((0, 0), (0, n_pad - n), (0, 0)))


# Max bf16 bytes (incl. double buffering) for keeping the full z slab resident.
_SLAB_VMEM_BUDGET = 4 * 1024 * 1024


def _pairwise_adj(z1, z2, *, gdc, mean_over_batch, out_dtype, same):
    """adj[b] = act(z1[b] @ z2[b]^T); optionally averaged over b inside the kernel."""
    B, N, D = z1.shape
    assert z2.shape == (B, N, D)
    n_pad = _round_up(N, 128)
    tile = _pick_tile(n_pad)
    ni = nj = n_pad // tile

    z1p = _pad_nodes(z1, n_pad).astype(jnp.bfloat16)
    z2p = z1p if same else _pad_nodes(z2, n_pad).astype(jnp.bfloat16)

    if mean_over_batch:
        kernel = functools.partial(_adj_pair_mean_kernel, gdc=gdc,
                                   inv_b=float(1.0 / B))
        adj = pl.pallas_call(
            kernel,
            out_shape=jax.ShapeDtypeStruct((1, n_pad, n_pad), out_dtype),
            grid_spec=pltpu.PrefetchScalarGridSpec(
                num_scalar_prefetch=0,
                grid=(ni, nj, B),                       # batch reduction innermost
                in_specs=[
                    pl.BlockSpec((1, tile, D), lambda i, j, b: (b, i, 0)),
                    pl.BlockSpec((1, tile, D), lambda i, j, b: (b, j, 0)),
                ],
                out_specs=pl.BlockSpec((1, tile, tile), lambda i, j, b: (0, i, j)),
                scratch_shapes=[pltpu.VMEM((tile, tile), jnp.float32)],
            ),
            compiler_params=pltpu.CompilerParams(
                dimension_semantics=("parallel", "parallel", "arbitrary")),
        )(z1p, z2p)
        return adj[:, :N, :N]

    if same and 2 * n_pad * D * 2 <= _SLAB_VMEM_BUDGET:
        # z passed once: full (N_pad, D) slab resident across the (i, j) loop.
        kernel = functools.partial(_adj_same_kernel, gdc=gdc, tile=tile)
        adj = pl.pallas_call(
            kernel,
            out_shape=jax.ShapeDtypeStruct((B, n_pad, n_pad), out_dtype),
            grid_spec=pltpu.PrefetchScalarGridSpec(
                num_scalar_prefetch=0,
                grid=(B, ni, nj),
                in_specs=[pl.BlockSpec((pl.Squeezed(), n_pad, D),
                                       lambda b, i, j: (b, 0, 0))],
                out_specs=pl.BlockSpec((1, tile, tile), lambda b, i, j: (b, i, j)),
            ),
            compiler_params=pltpu.CompilerParams(
                dimension_semantics=("parallel", "parallel", "parallel")),
        )(z1p)
        return adj[:, :N, :N]

    kernel = functools.partial(_adj_pair_kernel, gdc=gdc)
    adj = pl.pallas_call(
        kernel,
        out_shape=jax.ShapeDtypeStruct((B, n_pad, n_pad), out_dtype),
        grid_spec=pltpu.PrefetchScalarGridSpec(
            num_scalar_prefetch=0,
            grid=(B, ni, nj),
            in_specs=[
                pl.BlockSpec((1, tile, D), lambda b, i, j: (b, i, 0)),
                pl.BlockSpec((1, tile, D), lambda b, i, j: (b, j, 0)),
            ],
            out_specs=pl.BlockSpec((1, tile, tile), lambda b, i, j: (b, i, j)),
        ),
        compiler_params=pltpu.CompilerParams(
            dimension_semantics=("parallel", "parallel", "parallel")),
    )(z1p, z2p)
    return adj[:, :N, :N]


# --------------------------------------------------------------------------- #
# Module wrapper
# --------------------------------------------------------------------------- #
class SIGDecoderPallas:
    """JAX/Pallas re-implementation of the PyTorch SIGDecoder forward pass."""

    SMALL = 1e-16

    def __init__(self, zdim, dropout, decoder_type="inner", *, param_key,
                 out_dtype=jnp.bfloat16):
        self.zdim = zdim
        self.dropout = dropout
        self.gdc = decoder_type
        self.out_dtype = out_dtype
        # torch.nn.init.uniform_(rk_lgt, a=-6.0, b=0.0), shape (1, zdim)
        self.rk_lgt = jax.random.uniform(
            param_key, (1, zdim), dtype=jnp.float32, minval=-6.0, maxval=0.0)

    def __call__(self, z, edge_index=None, training=True, *, dropout_key=None):
        # F.dropout(z, p, training) -- inverted dropout, scale by 1/(1-p)
        if training and self.dropout > 0.0:
            assert dropout_key is not None, "dropout_key required when training"
            keep = jax.random.bernoulli(dropout_key, 1.0 - self.dropout, z.shape)
            z = jnp.where(keep, z / (1.0 - self.dropout), 0.0)

        assert self.zdim == z.shape[2], "zdim not compatible!"

        rk = jnp.sqrt(jax.nn.sigmoid(self.rk_lgt))          # (1, zdim)
        if self.gdc == "bp":
            z = z * rk.reshape(1, 1, self.zdim)

        if edge_index is None:
            z1, z2, same = z, z, True
        else:
            z1 = jnp.take(z, edge_index[0], axis=1)
            z2 = jnp.take(z, edge_index[1], axis=1)
            same = False

        adj = _pairwise_adj(z1, z2, gdc=self.gdc,
                            mean_over_batch=not training,
                            out_dtype=self.out_dtype, same=same)
        return adj, z, rk ** 2


# --------------------------------------------------------------------------- #
# Pure-JAX reference (post-dropout / post-rk-scaling) for correctness checks
# --------------------------------------------------------------------------- #
def _reference_adj(z1, z2, gdc, mean_over_batch, out_dtype):
    z1b = z1.astype(jnp.bfloat16).astype(jnp.float32)
    z2b = z2.astype(jnp.bfloat16).astype(jnp.float32)
    lgt = jnp.einsum("bnd,bmd->bnm", z1b, z2b)
    if gdc == "inner":
        adj = jax.nn.sigmoid(lgt)
    else:
        adj = 1.0 - jnp.exp(-jnp.exp(jnp.minimum(lgt, 25.0)))
    if mean_over_batch:
        adj = jnp.mean(adj, axis=0, keepdims=True)
    return adj.astype(out_dtype)


if __name__ == "__main__":
    B, N, D = 2, 16, 32          # batch, nodes, zdim
    dropout_p = 0.1

    root = jax.random.PRNGKey(0)
    k_param, k_z, k_drop = jax.random.split(root, 3)

    dec = SIGDecoderPallas(zdim=D, dropout=dropout_p, decoder_type="inner",
                           param_key=k_param)
    z = jax.random.normal(k_z, (B, N, D), dtype=jnp.float32)

    # --- training path (single-z slab kernel, per-batch adjacency) ----------
    adj, z_out, rk_sq = dec(z, edge_index=None, training=True, dropout_key=k_drop)
    jax.block_until_ready((adj, z_out, rk_sq))
    assert adj.shape == (B, N, N)
    assert z_out.shape == (B, N, D)
    assert rk_sq.shape == (1, D)
    adj_ref = _reference_adj(z_out, z_out, dec.gdc, False, dec.out_dtype)
    err = jnp.max(jnp.abs(adj.astype(jnp.float32) - adj_ref.astype(jnp.float32)))
    assert err < 2e-2, f"training path mismatch: {err}"

    # --- eval path (fused in-kernel batch mean) ------------------------------
    adj_e, z_e, _ = dec(z, edge_index=None, training=False)
    jax.block_until_ready(adj_e)
    assert adj_e.shape == (1, N, N)
    adj_e_ref = _reference_adj(z_e, z_e, dec.gdc, True, dec.out_dtype)
    err = jnp.max(jnp.abs(adj_e.astype(jnp.float32) - adj_e_ref.astype(jnp.float32)))
    assert err < 2e-2, f"eval path mismatch: {err}"

    # --- edge_index path (pair kernel with gathered rows) --------------------
    M = 8
    ei = jnp.stack([jnp.arange(M, dtype=jnp.int32),
                    (jnp.arange(M, dtype=jnp.int32) + 3) % N])
    adj_g, z_g, _ = dec(z, edge_index=ei, training=True, dropout_key=k_drop)
    jax.block_until_ready(adj_g)
    assert adj_g.shape == (B, M, M)
    z1g = jnp.take(z_g, ei[0], axis=1)
    z2g = jnp.take(z_g, ei[1], axis=1)
    adj_g_ref = _reference_adj(z1g, z2g, dec.gdc, False, dec.out_dtype)
    err = jnp.max(jnp.abs(adj_g.astype(jnp.float32) - adj_g_ref.astype(jnp.float32)))
    assert err < 2e-2, f"edge_index path mismatch: {err}"

    print("KERNEL_OK")
</pallas_src>

<mosaic_0001>
module attributes {stable_mosaic.version = 11 : i64} {
  func.func @_adj_same_kernel(%arg0: i32, %arg1: i32, %arg2: i32, %arg3: memref<1x128x32xbf16, #tpu.memory_space<vmem>>, %arg4: memref<1x128x128xbf16, #tpu.memory_space<vmem>>) attributes {dimension_semantics = [#tpu.dimension_semantics<parallel>, #tpu.dimension_semantics<parallel>, #tpu.dimension_semantics<parallel>], iteration_bounds = array<i64: 2, 1, 1>, scalar_prefetch = 0 : i64, scratch_operands = 0 : i64, tpu.core_type = #tpu.core_type<tc>, window_params = [{transform_indices = @transform_0, window_bounds = array<i64: 1, 128, 32>}, {transform_indices = @transform_1, window_bounds = array<i64: 1, 128, 128>}]} {
    %c128_i32 = arith.constant 128 : i32
    %0 = arith.muli %arg1, %c128_i32 : i32
    %1 = tpu.assume_multiple %0, 128 : i32
    %c0 = arith.constant 0 : index
    %2 = arith.index_cast %1 : i32 to index
    %c0_0 = arith.constant 0 : index
    %3 = vector.load %arg3[%c0, %2, %c0_0] : memref<1x128x32xbf16, #tpu.memory_space<vmem>>, vector<1x128x32xbf16>
    %4 = vector.shape_cast %3 : vector<1x128x32xbf16> to vector<128x32xbf16>
    %c128_i32_1 = arith.constant 128 : i32
    %5 = arith.muli %arg2, %c128_i32_1 : i32
    %6 = tpu.assume_multiple %5, 128 : i32
    %c0_2 = arith.constant 0 : index
    %7 = arith.index_cast %6 : i32 to index
    %c0_3 = arith.constant 0 : index
    %8 = vector.load %arg3[%c0_2, %7, %c0_3] : memref<1x128x32xbf16, #tpu.memory_space<vmem>>, vector<1x128x32xbf16>
    %9 = vector.shape_cast %8 : vector<1x128x32xbf16> to vector<128x32xbf16>
    %cst = arith.constant dense<0.000000e+00> : vector<128x128xf32>
    %10 = tpu.matmul %4, %9, %cst {dimension_numbers = #tpu.dot_dimension_numbers<[1], [1], [0], [0], [0, 0, 1, 0], [], []>} : vector<128x32xbf16>, vector<128x32xbf16>, vector<128x128xf32> -> vector<128x128xf32>
    %11 = arith.negf %10 : vector<128x128xf32>
    %12 = math.exp %11 : vector<128x128xf32>
    %cst_4 = arith.constant 1.000000e+00 : f32
    %13 = vector.broadcast %cst_4 : f32 to vector<128x128xf32>
    %14 = arith.addf %13, %12 : vector<128x128xf32>
    %15 = arith.divf %13, %14 : vector<128x128xf32>
    %16 = arith.truncf %15 : vector<128x128xf32> to vector<128x128xbf16>
    %c0_5 = arith.constant 0 : index
    %c0_6 = arith.constant 0 : index
    %c0_7 = arith.constant 0 : index
    %17 = vector.load %arg4[%c0_5, %c0_6, %c0_7] : memref<1x128x128xbf16, #tpu.memory_space<vmem>>, vector<1x128x128xbf16>
    %18 = vector.shape_cast %17 : vector<1x128x128xbf16> to vector<128x128xbf16>
    %19 = vector.shape_cast %16 : vector<128x128xbf16> to vector<1x128x128xbf16>
    tpu.vector_store %arg4[%c0_5, %c0_6, %c0_7], %19 {strides = array<i32>} : memref<1x128x128xbf16, #tpu.memory_space<vmem>>, vector<1x128x128xbf16>,
    return
  }
  func.func @transform_0(%arg0: i32, %arg1: i32, %arg2: i32) -> (i32, i32, i32) {
    %c0_i32 = arith.constant 0 : i32
    %c0_i32_0 = arith.constant 0 : i32
    %c0_i32_1 = arith.constant 0 : i32
    return %arg0, %c0_i32, %c0_i32_0 : i32, i32, i32
  }
  func.func @transform_1(%arg0: i32, %arg1: i32, %arg2: i32) -> (i32, i32, i32) {
    %c0_i32 = arith.constant 0 : i32
    return %arg0, %arg1, %arg2 : i32, i32, i32
  }
}

</mosaic_0001>

<llo_original>
// kernel: tpu_custom_call.1
$region0: #{tpu_custom_call.1}
  #allocation0 [shape = 'u32[]', space=smem, size = 0x4, offset = 0x4, fixed_abs, tag = 'smem constant byte address 0x4 - core index']
  #allocation1 [shape = 'u32[72,128]{1,0:T(1,128)}', space=vmem, size = 0x9000, scoped, tag = 'internal scratch']
  %s0 = inlined_call_operand.vmem [shape: bf16[2,128,32], index: 0, kind: input, shape index: {}]
  %s1 = inlined_call_operand.hbm [shape: bf16[2,128,128], index: 1, kind: output, shape index: {}]
  %s2 = sld [smem:[#allocation0]]
  $region37: #{tpu_custom_call.1} parent=0
    _
  %s4 = ssub.s32 1, %s2
  %s5 = scalar_select 0, %s4, %s2
  $region1: #{tpu_custom_call.1} parent=0
    #allocation2 [shape = 'u8[65536]{0}', space=vmem, size = 0x10000, scoped, tag = 'output window, operand 0']
    #allocation3 [shape = 's32[2]{0}', space=sflag, size = 0x8, scoped, tag = 'scoped memory for tpu_custom_call.1']
    %6 = vsyncpa [#allocation3], 0
    %s7 = scalar_lea.sflag [#allocation3], 1
    %8 = vsyncpa %s7, 0
    loop: start=0, step=1, limit=4
    $region2: #{tpu_custom_call.1} parent=1 // loop_pre_header
      _
    $region3: #{tpu_custom_call.1} parent=1 // loop_header
      %s10 = sphi 0, %s14
      %p11 = scmp.ge.s32.totalorder %s10, 4
      %s17 = sphi 0, %s36
      %s18 = sphi 0, %s32
      %s19 = sphi 0, %s28
      %s20 = sphi 0, %s17
      %s21 = sphi 0, %s18
      %s22 = sphi 0, %s19
      %s23 = sphi 0, %s20
      %s24 = sphi 0, %s21
      %s25 = sphi 0, %s22
      %s39 = sphi 0, %s41
      %s42 = sphi 0, %s39
      %s43 = sphi 0, %s42
      %s59 = sphi 0, %s43
      %s69 = sphi 0, %s71
      %s72 = sphi 0, %s69
      %s73 = sphi 0, %s72
      %s89 = sphi 0, %s73
    $region4: #{tpu_custom_call.1} parent=1 // loop_header_branch
      %13 = sbr.rel (%p11) target = $region8
    $region5: #{tpu_custom_call.1} parent=1 // loop_body
      %s15 = ssub.s32 %s10, 1
      %s16 = ssub.s32 %s10, 2
      %s26 = sadd.s32 1, %s19
      %p27 = scmp.ge.s32.totalorder %s26, 1
      %s28 = scalar_select %p27, 0, %s26
      %s29 = sadd.s32 1, %s18
      %s30 = scalar_select %p27, %s29, %s18
      %p31 = scmp.ge.s32.totalorder %s30, 1
      %s32 = scalar_select %p31, 0, %s30
      %s33 = sadd.s32 1, %s17
      %s34 = scalar_select %p31, %s33, %s17
      %p35 = scmp.ge.s32.totalorder %s34, 2
      %s36 = scalar_select %p35, 0, %s34
      %s37 = ssub.s32 %s17, %s36
      %p38 = scmp.eq.s32.totalorder %s37, 0
      %s40 = sadd.s32 %s39, 1
      %s41 = scalar_select %p38, %s39, %s40
      %p44 = pneg %p38
      %p45 = scmp.eq.s32.totalorder %s10, 1
      %p46 = por %p44, %p45
      %p47 = scmp.ne.s32.totalorder %s39, %s42
      %p48 = scmp.eq.s32.totalorder %s10, 0
      %p49 = por %p47, %p48
      %p50 = scmp.ne.s32.totalorder %s39, %s42
      %p51 = scmp.eq.s32.totalorder %s15, 1
      %p52 = por %p50, %p51
      %p53 = scmp.ne.s32.totalorder %s42, %s43
      %p54 = scmp.eq.s32.totalorder %s15, 0
      %p55 = por %p53, %p54
      %p56 = scmp.ne.s32.totalorder %s42, %s43
      %p57 = scmp.eq.s32.totalorder %s16, 1
      %p58 = por %p56, %p57
      %p60 = scmp.ne.s32.totalorder %s43, %s59
      %p61 = scmp.eq.s32.totalorder %s16, 0
      %p62 = por %p60, %p61
      %s63 = ssub.s32 %s17, %s36
      %s64 = ssub.s32 %s18, %s32
      %s65 = sor.u32 %s63, %s64
      %s66 = ssub.s32 %s19, %s28
      %s67 = sor.u32 %s65, %s66
      %p68 = scmp.eq.s32.totalorder %s67, 0
      %s70 = sadd.s32 %s69, 1
      %s71 = scalar_select %p68, %s69, %s70
      %p74 = pneg %p68
      %p75 = scmp.eq.s32.totalorder %s10, 1
      %p76 = por %p74, %p75
      %p77 = scmp.ne.s32.totalorder %s69, %s72
      %p78 = scmp.eq.s32.totalorder %s10, 0
      %p79 = por %p77, %p78
      %p80 = scmp.ne.s32.totalorder %s69, %s72
      %p81 = scmp.eq.s32.totalorder %s15, 1
      %p82 = por %p80, %p81
      %p83 = scmp.ne.s32.totalorder %s72, %s73
      %p84 = scmp.eq.s32.totalorder %s15, 0
      %p85 = por %p83, %p84
      %p86 = scmp.ne.s32.totalorder %s72, %s73
      %p87 = scmp.eq.s32.totalorder %s16, 1
      %p88 = por %p86, %p87
      %p90 = scmp.ne.s32.totalorder %s73, %s89
      %p91 = scmp.eq.s32.totalorder %s16, 0
      %p92 = por %p90, %p91
      %p93 = scmp.le.s32.totalorder 1, %s10
      %p94 = scmp.lt.s32.totalorder %s10, 3
      %p95 = pnand %p93, %p94
      %p96 = pneg %p95
      // Predicated region
      $region9: #{tpu_custom_call.1} parent=5 // pred_check
        _
      $region10: #{tpu_custom_call.1} parent=5 // pred_check_branch
        %98 = sbr.rel (%p95) target = $region12
      $region11: #{tpu_custom_call.1} parent=5 // pred_region
        %s99 = ssub.s32 %s10, 1
      $region12: #{tpu_custom_call.1} parent=5 // pred_fallthru
        _
      %p100 = scmp.lt.s32.totalorder %s10, 2
      // Predicated region
      $region13: #{tpu_custom_call.1} parent=5 // pred_check
        %p101 = pneg %p100
      $region14: #{tpu_custom_call.1} parent=5 // pred_check_branch
        %103 = sbr.rel (%p101) target = $region16
      $region15: #{tpu_custom_call.1} parent=5 // pred_region
        // Predicated region
        $region17: #{tpu_custom_call.1} parent=15 // pred_check
          %p104 = pneg %p49
        $region18: #{tpu_custom_call.1} parent=15 // pred_check_branch
          %106 = sbr.rel (%p104) target = $region20
        $region19: #{tpu_custom_call.1} parent=15 // pred_region
          %p107 = scmp.lt.s32.totalorder %s17, 1
          %s108 = scalar_select %p107, %s17, 1
          %s109 = smul.addr %s108, 16
          %s110 = smul.addr %s109, 4
          %s111 = scalar_lea.vmem %s0, %s110
        $region20: #{tpu_custom_call.1} parent=15 // pred_fallthru
          _
      $region16: #{tpu_custom_call.1} parent=5 // pred_fallthru
        _
      %p112 = scmp.le.s32.totalorder 1, %s10
      %p113 = scmp.lt.s32.totalorder %s10, 3
      %p114 = pnand %p112, %p113
      %p115 = pneg %p114
      // Predicated region
      $region21: #{tpu_custom_call.1} parent=5 // pred_check
        _
      $region22: #{tpu_custom_call.1} parent=5 // pred_check_branch
        %117 = sbr.rel (%p114) target = $region24
      $region23: #{tpu_custom_call.1} parent=5 // pred_region
        %s118 = ssub.s32 %s10, 1
        %p119 = scmp.lt.s32.totalorder %s20, 1
        %s120 = scalar_select %p119, %s20, 1
        %s121 = smul.addr %s120, 16
        %s122 = smul.addr %s121, 4
        %s123 = scalar_lea.vmem %s0, %s122
        %p124 = pneg %p55
        %p125 = pneg %p52
        %p126 = pneg %p85
        %p127 = pneg %p82
        %s128 = sand.u32 %s72, 1
        %s129 = scalar_lea.sflag [#allocation3], %s128
        %s130 = sand.u32 %s72, 1
        %s131 = smul.addr %s130, 64
        %s132 = scalar_lea.vmem [#allocation2], %s131
        %p133 = scmp.lt.s32.totalorder %s20, 1
        %s134 = scalar_select %p133, %s20, 1
        %s135 = smul.addr %s134, 16
        %s136 = smul.addr %s135, 4
        %s137 = scalar_lea.vmem %s0, %s136
        %s138 = smul.u32 16, %s21
        %s139 = smul.u32 %s21, 128
        %s140 = sshra.s32 %s139, 3
        %s141 = sand.u32 %s139, 7
        %s142 = smul.addr %s140, 4
        %s143 = scalar_lea.vmem %s137, %s142
        %v144 = vld [vmem:[%s143] sm:$0xf]
        %v145 = vld [vmem:[%s143 + $0x4] sm:$0xf]
        %v146 = vld [vmem:[%s143 + $0x8] sm:$0xf]
        %v147 = vld [vmem:[%s143 + $0xc] sm:$0xf]
        %v148 = vld [vmem:[%s143 + $0x10] sm:$0xf]
        %v149 = vld [vmem:[%s143 + $0x14] sm:$0xf]
        %v150 = vld [vmem:[%s143 + $0x18] sm:$0xf]
        %v151 = vld [vmem:[%s143 + $0x1c] sm:$0xf]
        %v152 = vld [vmem:[%s143 + $0x20] sm:$0xf]
        %v153 = vld [vmem:[%s143 + $0x24] sm:$0xf]
        %v154 = vld [vmem:[%s143 + $0x28] sm:$0xf]
        %v155 = vld [vmem:[%s143 + $0x2c] sm:$0xf]
        %v156 = vld [vmem:[%s143 + $0x30] sm:$0xf]
        %v157 = vld [vmem:[%s143 + $0x34] sm:$0xf]
        %v158 = vld [vmem:[%s143 + $0x38] sm:$0xf]
        %v159 = vld [vmem:[%s143 + $0x3c] sm:$0xf]
        %s160 = smul.u32 %s22, 128
        %s161 = sshra.s32 %s160, 3
        %s162 = sand.u32 %s160, 7
        %s163 = smul.addr %s161, 4
        %s164 = scalar_lea.vmem %s137, %s163
        %v165 = vld [vmem:[%s164] sm:$0xf]
        %v166 = vld [vmem:[%s164 + $0x4] sm:$0xf]
        %v167 = vld [vmem:[%s164 + $0x8] sm:$0xf]
        %v168 = vld [vmem:[%s164 + $0xc] sm:$0xf]
        %v169 = vld [vmem:[%s164 + $0x10] sm:$0xf]
        %v170 = vld [vmem:[%s164 + $0x14] sm:$0xf]
        %v171 = vld [vmem:[%s164 + $0x18] sm:$0xf]
        %v172 = vld [vmem:[%s164 + $0x1c] sm:$0xf]
        %v173 = vld [vmem:[%s164 + $0x20] sm:$0xf]
        %v174 = vld [vmem:[%s164 + $0x24] sm:$0xf]
        %v175 = vld [vmem:[%s164 + $0x28] sm:$0xf]
        %v176 = vld [vmem:[%s164 + $0x2c] sm:$0xf]
        %v177 = vld [vmem:[%s164 + $0x30] sm:$0xf]
        %v178 = vld [vmem:[%s164 + $0x34] sm:$0xf]
        %v179 = vld [vmem:[%s164 + $0x38] sm:$0xf]
        %v180 = vld [vmem:[%s164 + $0x3c] sm:$0xf]
        %v197 = vunpack.c.l.b16 %v144
        %v198 = vunpack.c.l.b16 %v145
        %v199 = vunpack.c.l.b16 %v146
        %v200 = vunpack.c.l.b16 %v147
        %v201 = vunpack.c.l.b16 %v148
        %v202 = vunpack.c.l.b16 %v149
        %v203 = vunpack.c.l.b16 %v150
        %v204 = vunpack.c.l.b16 %v151
        %v205 = vunpack.c.l.b16 %v152
        %v206 = vunpack.c.l.b16 %v153
        %v207 = vunpack.c.l.b16 %v154
        %v208 = vunpack.c.l.b16 %v155
        %v209 = vunpack.c.l.b16 %v156
        %v210 = vunpack.c.l.b16 %v157
        %v211 = vunpack.c.l.b16 %v158
        %v212 = vunpack.c.l.b16 %v159
        %v213 = vpack.c.b16 %v198, %v197
        %v214 = vpack.c.b16 %v200, %v199
        %v215 = vpack.c.b16 %v202, %v201
        %v216 = vpack.c.b16 %v204, %v203
        %v217 = vpack.c.b16 %v206, %v205
        %v218 = vpack.c.b16 %v208, %v207
        %v219 = vpack.c.b16 %v210, %v209
        %v220 = vpack.c.b16 %v212, %v211
        %v237 = vunpack.c.l.b16 %v165
        %v238 = vunpack.c.l.b16 %v166
        %v239 = vunpack.c.l.b16 %v167
        %v240 = vunpack.c.l.b16 %v168
        %v241 = vunpack.c.l.b16 %v169
        %v242 = vunpack.c.l.b16 %v170
        %v243 = vunpack.c.l.b16 %v171
        %v244 = vunpack.c.l.b16 %v172
        %v245 = vunpack.c.l.b16 %v173
        %v246 = vunpack.c.l.b16 %v174
        %v247 = vunpack.c.l.b16 %v175
        %v248 = vunpack.c.l.b16 %v176
        %v249 = vunpack.c.l.b16 %v177
        %v250 = vunpack.c.l.b16 %v178
        %v251 = vunpack.c.l.b16 %v179
        %v252 = vunpack.c.l.b16 %v180
        %v253 = vpack.c.b16 %v238, %v237
        %v254 = vpack.c.b16 %v240, %v239
        %v255 = vpack.c.b16 %v242, %v241
        %v256 = vpack.c.b16 %v244, %v243
        %v257 = vpack.c.b16 %v246, %v245
        %v258 = vpack.c.b16 %v248, %v247
        %v259 = vpack.c.b16 %v250, %v249
        %v260 = vpack.c.b16 %v252, %v251
        %vm261 = vcmask 261120
        %v263 = vsel %vm261, %v213, 0
        %v266 = vsel %vm261, %v214, 0
        %v269 = vsel %vm261, %v215, 0
        %v272 = vsel %vm261, %v216, 0
        %v275 = vsel %vm261, %v217, 0
        %v278 = vsel %vm261, %v218, 0
        %v281 = vsel %vm261, %v219, 0
        %v284 = vsel %vm261, %v220, 0
        %v287 = vsel %vm261, %v253, 0
        %v290 = vsel %vm261, %v254, 0
        %v293 = vsel %vm261, %v255, 0
        %v296 = vsel %vm261, %v256, 0
        %v299 = vsel %vm261, %v257, 0
        %v302 = vsel %vm261, %v258, 0
        %v305 = vsel %vm261, %v259, 0
        %v308 = vsel %vm261, %v260, 0
        %310 = vmatpush.bf16.xpose.msra.mxu0 %v308
        %311 = vmatpush.bf16.xpose.msra.mxu0 %v305
        %312 = vmatpush.bf16.xpose.msra.mxu0 %v302
        %313 = vmatpush.bf16.xpose.msra.mxu0 %v299
        %314 = vmatpush.bf16.xpose.msra.mxu0 %v296
        %315 = vmatpush.bf16.xpose.msra.mxu0 %v293
        %316 = vmatpush.bf16.xpose.msra.mxu0 %v290
        %317 = vmatpush.bf16.xpose.msra.mxu0 %v287
        %318 = vmatmul.bf16.gmra.mxu0 %v263
        %v319 = vpop.f32.mrf.mxu0
        %v320 = vadd.f32 0.0, %v319
        %v321 = vpop.f32.mrf.mxu0
        %v322 = vadd.f32 0.0, %v321
        %323 = vmatmul.bf16.gmra.mxu0 %v266
        %v324 = vpop.f32.mrf.mxu0
        %v325 = vadd.f32 0.0, %v324
        %v326 = vpop.f32.mrf.mxu0
        %v327 = vadd.f32 0.0, %v326
        %328 = vmatmul.bf16.gmra.mxu0 %v269
        %v329 = vpop.f32.mrf.mxu0
        %v330 = vadd.f32 0.0, %v329
        %v331 = vpop.f32.mrf.mxu0
        %v332 = vadd.f32 0.0, %v331
        %333 = vmatmul.bf16.gmra.mxu0 %v272
        %v334 = vpop.f32.mrf.mxu0
        %v335 = vadd.f32 0.0, %v334
        %v336 = vpop.f32.mrf.mxu0
        %v337 = vadd.f32 0.0, %v336
        %338 = vmatmul.bf16.gmra.mxu0 %v275
        %v339 = vpop.f32.mrf.mxu0
        %v340 = vadd.f32 0.0, %v339
        %v341 = vpop.f32.mrf.mxu0
        %v342 = vadd.f32 0.0, %v341
        %343 = vmatmul.bf16.gmra.mxu0 %v278
        %v344 = vpop.f32.mrf.mxu0
        %v345 = vadd.f32 0.0, %v344
        %v346 = vpop.f32.mrf.mxu0
        %v347 = vadd.f32 0.0, %v346
        %348 = vmatmul.bf16.gmra.mxu0 %v281
        %v349 = vpop.f32.mrf.mxu0
        %v350 = vadd.f32 0.0, %v349
        %v351 = vpop.f32.mrf.mxu0
        %v352 = vadd.f32 0.0, %v351
        %353 = vmatmul.bf16.gmra.mxu0 %v284
        %v354 = vpop.f32.mrf.mxu0
        %v355 = vadd.f32 0.0, %v354
        %v356 = vpop.f32.mrf.mxu0
        %v357 = vadd.f32 0.0, %v356
        %358 = vdwg.mxu0
        %v359 = vxor.u32 %v320, 2147483648
        %v360 = vxor.u32 %v322, 2147483648
        %v361 = vxor.u32 %v325, 2147483648
        %v362 = vxor.u32 %v327, 2147483648
        %v363 = vxor.u32 %v330, 2147483648
        %v364 = vxor.u32 %v332, 2147483648
        %v365 = vxor.u32 %v335, 2147483648
        %v366 = vxor.u32 %v337, 2147483648
        %v367 = vxor.u32 %v340, 2147483648
        %v368 = vxor.u32 %v342, 2147483648
        %v369 = vxor.u32 %v345, 2147483648
        %v370 = vxor.u32 %v347, 2147483648
        %v371 = vxor.u32 %v350, 2147483648
        %v372 = vxor.u32 %v352, 2147483648
        %v373 = vxor.u32 %v355, 2147483648
        %v374 = vxor.u32 %v357, 2147483648
        %v375 = vmul.f32 %v359, 1.442695
        %v376 = vpow.pop %v375
        %v377 = vmul.f32 %v360, 1.442695
        %v378 = vpow.pop %v377
        %v379 = vmul.f32 %v361, 1.442695
        %v380 = vpow.pop %v379
        %v381 = vmul.f32 %v362, 1.442695
        %v382 = vpow.pop %v381
        %v383 = vmul.f32 %v363, 1.442695
        %v384 = vpow.pop %v383
        %v385 = vmul.f32 %v364, 1.442695
        %v386 = vpow.pop %v385
        %v387 = vmul.f32 %v365, 1.442695
        %v388 = vpow.pop %v387
        %v389 = vmul.f32 %v366, 1.442695
        %v390 = vpow.pop %v389
        %v391 = vmul.f32 %v367, 1.442695
        %v392 = vpow.pop %v391
        %v393 = vmul.f32 %v368, 1.442695
        %v394 = vpow.pop %v393
        %v395 = vmul.f32 %v369, 1.442695
        %v396 = vpow.pop %v395
        %v397 = vmul.f32 %v370, 1.442695
        %v398 = vpow.pop %v397
        %v399 = vmul.f32 %v371, 1.442695
        %v400 = vpow.pop %v399
        %v401 = vmul.f32 %v372, 1.442695
        %v402 = vpow.pop %v401
        %v403 = vmul.f32 %v373, 1.442695
        %v404 = vpow.pop %v403
        %v405 = vmul.f32 %v374, 1.442695
        %v406 = vpow.pop %v405
        %v407 = vadd.f32 %v376, 1.0
        %v408 = vadd.f32 %v378, 1.0
        %v409 = vadd.f32 %v380, 1.0
        %v410 = vadd.f32 %v382, 1.0
        %v411 = vadd.f32 %v384, 1.0
        %v412 = vadd.f32 %v386, 1.0
        %v413 = vadd.f32 %v388, 1.0
        %v414 = vadd.f32 %v390, 1.0
        %v415 = vadd.f32 %v392, 1.0
        %v416 = vadd.f32 %v394, 1.0
        %v417 = vadd.f32 %v396, 1.0
        %v418 = vadd.f32 %v398, 1.0
        %v419 = vadd.f32 %v400, 1.0
        %v420 = vadd.f32 %v402, 1.0
        %v421 = vadd.f32 %v404, 1.0
        %v422 = vadd.f32 %v406, 1.0
        %v423 = vrcp.pop %v407
        %v424 = vmul.f32 %v407, %v423
        %v425 = vsub.f32 1.0, %v424
        %v426 = vmul.f32 %v423, %v425
        %v427 = vadd.f32 %v423, %v426
        %vm428 = vweird.f32 %v407
        %vm429 = vweird.f32 %v423
        %vm430 = vmor %vm428, %vm429
        %v431 = vsel %vm430, %v423, %v427
        %v432 = vand.u32 2147483647, %v407
        %vm433 = vcmp.eq.f32.partialorder %v432, 8.507059e+37
        %v434 = vand.u32 %v407, 2147483648
        %v435 = vor.u32 1.1754944e-38, %v434
        %v436 = vsel %vm433, %v435, %v431
        %v437 = vmul.f32 1.0, %v436
        %v438 = vrcp.pop %v408
        %v439 = vmul.f32 %v408, %v438
        %v440 = vsub.f32 1.0, %v439
        %v441 = vmul.f32 %v438, %v440
        %v442 = vadd.f32 %v438, %v441
        %vm443 = vweird.f32 %v408
        %vm444 = vweird.f32 %v438
        %vm445 = vmor %vm443, %vm444
        %v446 = vsel %vm445, %v438, %v442
        %v447 = vand.u32 2147483647, %v408
        %vm448 = vcmp.eq.f32.partialorder %v447, 8.507059e+37
        %v449 = vand.u32 %v408, 2147483648
        %v450 = vor.u32 1.1754944e-38, %v449
        %v451 = vsel %vm448, %v450, %v446
        %v452 = vmul.f32 1.0, %v451
        %v453 = vrcp.pop %v409
        %v454 = vmul.f32 %v409, %v453
        %v455 = vsub.f32 1.0, %v454
        %v456 = vmul.f32 %v453, %v455
        %v457 = vadd.f32 %v453, %v456
        %vm458 = vweird.f32 %v409
        %vm459 = vweird.f32 %v453
        %vm460 = vmor %vm458, %vm459
        %v461 = vsel %vm460, %v453, %v457
        %v462 = vand.u32 2147483647, %v409
        %vm463 = vcmp.eq.f32.partialorder %v462, 8.507059e+37
        %v464 = vand.u32 %v409, 2147483648
        %v465 = vor.u32 1.1754944e-38, %v464
        %v466 = vsel %vm463, %v465, %v461
        %v467 = vmul.f32 1.0, %v466
        %v468 = vrcp.pop %v410
        %v469 = vmul.f32 %v410, %v468
        %v470 = vsub.f32 1.0, %v469
        %v471 = vmul.f32 %v468, %v470
        %v472 = vadd.f32 %v468, %v471
        %vm473 = vweird.f32 %v410
        %vm474 = vweird.f32 %v468
        %vm475 = vmor %vm473, %vm474
        %v476 = vsel %vm475, %v468, %v472
        %v477 = vand.u32 2147483647, %v410
        %vm478 = vcmp.eq.f32.partialorder %v477, 8.507059e+37
        %v479 = vand.u32 %v410, 2147483648
        %v480 = vor.u32 1.1754944e-38, %v479
        %v481 = vsel %vm478, %v480, %v476
        %v482 = vmul.f32 1.0, %v481
        %v483 = vrcp.pop %v411
        %v484 = vmul.f32 %v411, %v483
        %v485 = vsub.f32 1.0, %v484
        %v486 = vmul.f32 %v483, %v485
        %v487 = vadd.f32 %v483, %v486
        %vm488 = vweird.f32 %v411
        %vm489 = vweird.f32 %v483
        %vm490 = vmor %vm488, %vm489
        %v491 = vsel %vm490, %v483, %v487
        %v492 = vand.u32 2147483647, %v411
        %vm493 = vcmp.eq.f32.partialorder %v492, 8.507059e+37
        %v494 = vand.u32 %v411, 2147483648
        %v495 = vor.u32 1.1754944e-38, %v494
        %v496 = vsel %vm493, %v495, %v491
        %v497 = vmul.f32 1.0, %v496
        %v498 = vrcp.pop %v412
        %v499 = vmul.f32 %v412, %v498
        %v500 = vsub.f32 1.0, %v499
        %v501 = vmul.f32 %v498, %v500
        %v502 = vadd.f32 %v498, %v501
        %vm503 = vweird.f32 %v412
        %vm504 = vweird.f32 %v498
        %vm505 = vmor %vm503, %vm504
        %v506 = vsel %vm505, %v498, %v502
        %v507 = vand.u32 2147483647, %v412
        %vm508 = vcmp.eq.f32.partialorder %v507, 8.507059e+37
        %v509 = vand.u32 %v412, 2147483648
        %v510 = vor.u32 1.1754944e-38, %v509
        %v511 = vsel %vm508, %v510, %v506
        %v512 = vmul.f32 1.0, %v511
        %v513 = vrcp.pop %v413
        %v514 = vmul.f32 %v413, %v513
        %v515 = vsub.f32 1.0, %v514
        %v516 = vmul.f32 %v513, %v515
        %v517 = vadd.f32 %v513, %v516
        %vm518 = vweird.f32 %v413
        %vm519 = vweird.f32 %v513
        %vm520 = vmor %vm518, %vm519
        %v521 = vsel %vm520, %v513, %v517
        %v522 = vand.u32 2147483647, %v413
        %vm523 = vcmp.eq.f32.partialorder %v522, 8.507059e+37
        %v524 = vand.u32 %v413, 2147483648
        %v525 = vor.u32 1.1754944e-38, %v524
        %v526 = vsel %vm523, %v525, %v521
        %v527 = vmul.f32 1.0, %v526
        %v528 = vrcp.pop %v414
        %v529 = vmul.f32 %v414, %v528
        %v530 = vsub.f32 1.0, %v529
        %v531 = vmul.f32 %v528, %v530
        %v532 = vadd.f32 %v528, %v531
        %vm533 = vweird.f32 %v414
        %vm534 = vweird.f32 %v528
        %vm535 = vmor %vm533, %vm534
        %v536 = vsel %vm535, %v528, %v532
        %v537 = vand.u32 2147483647, %v414
        %vm538 = vcmp.eq.f32.partialorder %v537, 8.507059e+37
        %v539 = vand.u32 %v414, 2147483648
        %v540 = vor.u32 1.1754944e-38, %v539
        %v541 = vsel %vm538, %v540, %v536
        %v542 = vmul.f32 1.0, %v541
        %v543 = vrcp.pop %v415
        %v544 = vmul.f32 %v415, %v543
        %v545 = vsub.f32 1.0, %v544
        %v546 = vmul.f32 %v543, %v545
        %v547 = vadd.f32 %v543, %v546
        %vm548 = vweird.f32 %v415
        %vm549 = vweird.f32 %v543
        %vm550 = vmor %vm548, %vm549
        %v551 = vsel %vm550, %v543, %v547
        %v552 = vand.u32 2147483647, %v415
        %vm553 = vcmp.eq.f32.partialorder %v552, 8.507059e+37
        %v554 = vand.u32 %v415, 2147483648
        %v555 = vor.u32 1.1754944e-38, %v554
        %v556 = vsel %vm553, %v555, %v551
        %v557 = vmul.f32 1.0, %v556
        %v558 = vrcp.pop %v416
        %v559 = vmul.f32 %v416, %v558
        %v560 = vsub.f32 1.0, %v559
        %v561 = vmul.f32 %v558, %v560
        %v562 = vadd.f32 %v558, %v561
        %vm563 = vweird.f32 %v416
        %vm564 = vweird.f32 %v558
        %vm565 = vmor %vm563, %vm564
        %v566 = vsel %vm565, %v558, %v562
        %v567 = vand.u32 2147483647, %v416
        %vm568 = vcmp.eq.f32.partialorder %v567, 8.507059e+37
        %v569 = vand.u32 %v416, 2147483648
        %v570 = vor.u32 1.1754944e-38, %v569
        %v571 = vsel %vm568, %v570, %v566
        %v572 = vmul.f32 1.0, %v571
        %v573 = vrcp.pop %v417
        %v574 = vmul.f32 %v417, %v573
        %v575 = vsub.f32 1.0, %v574
        %v576 = vmul.f32 %v573, %v575
        %v577 = vadd.f32 %v573, %v576
        %vm578 = vweird.f32 %v417
        %vm579 = vweird.f32 %v573
        %vm580 = vmor %vm578, %vm579
        %v581 = vsel %vm580, %v573, %v577
        %v582 = vand.u32 2147483647, %v417
        %vm583 = vcmp.eq.f32.partialorder %v582, 8.507059e+37
        %v584 = vand.u32 %v417, 2147483648
        %v585 = vor.u32 1.1754944e-38, %v584
        %v586 = vsel %vm583, %v585, %v581
        %v587 = vmul.f32 1.0, %v586
        %v588 = vrcp.pop %v418
        %v589 = vmul.f32 %v418, %v588
        %v590 = vsub.f32 1.0, %v589
        %v591 = vmul.f32 %v588, %v590
        %v592 = vadd.f32 %v588, %v591
        %vm593 = vweird.f32 %v418
        %vm594 = vweird.f32 %v588
        %vm595 = vmor %vm593, %vm594
        %v596 = vsel %vm595, %v588, %v592
        %v597 = vand.u32 2147483647, %v418
        %vm598 = vcmp.eq.f32.partialorder %v597, 8.507059e+37
        %v599 = vand.u32 %v418, 2147483648
        %v600 = vor.u32 1.1754944e-38, %v599
        %v601 = vsel %vm598, %v600, %v596
        %v602 = vmul.f32 1.0, %v601
        %v603 = vrcp.pop %v419
        %v604 = vmul.f32 %v419, %v603
        %v605 = vsub.f32 1.0, %v604
        %v606 = vmul.f32 %v603, %v605
        %v607 = vadd.f32 %v603, %v606
        %vm608 = vweird.f32 %v419
        %vm609 = vweird.f32 %v603
        %vm610 = vmor %vm608, %vm609
        %v611 = vsel %vm610, %v603, %v607
        %v612 = vand.u32 2147483647, %v419
        %vm613 = vcmp.eq.f32.partialorder %v612, 8.507059e+37
        %v614 = vand.u32 %v419, 2147483648
        %v615 = vor.u32 1.1754944e-38, %v614
        %v616 = vsel %vm613, %v615, %v611
        %v617 = vmul.f32 1.0, %v616
        %v618 = vrcp.pop %v420
        %v619 = vmul.f32 %v420, %v618
        %v620 = vsub.f32 1.0, %v619
        %v621 = vmul.f32 %v618, %v620
        %v622 = vadd.f32 %v618, %v621
        %vm623 = vweird.f32 %v420
        %vm624 = vweird.f32 %v618
        %vm625 = vmor %vm623, %vm624
        %v626 = vsel %vm625, %v618, %v622
        %v627 = vand.u32 2147483647, %v420
        %vm628 = vcmp.eq.f32.partialorder %v627, 8.507059e+37
        %v629 = vand.u32 %v420, 2147483648
        %v630 = vor.u32 1.1754944e-38, %v629
        %v631 = vsel %vm628, %v630, %v626
        %v632 = vmul.f32 1.0, %v631
        %v633 = vrcp.pop %v421
        %v634 = vmul.f32 %v421, %v633
        %v635 = vsub.f32 1.0, %v634
        %v636 = vmul.f32 %v633, %v635
        %v637 = vadd.f32 %v633, %v636
        %vm638 = vweird.f32 %v421
        %vm639 = vweird.f32 %v633
        %vm640 = vmor %vm638, %vm639
        %v641 = vsel %vm640, %v633, %v637
        %v642 = vand.u32 2147483647, %v421
        %vm643 = vcmp.eq.f32.partialorder %v642, 8.507059e+37
        %v644 = vand.u32 %v421, 2147483648
        %v645 = vor.u32 1.1754944e-38, %v644
        %v646 = vsel %vm643, %v645, %v641
        %v647 = vmul.f32 1.0, %v646
        %v648 = vrcp.pop %v422
        %v649 = vmul.f32 %v422, %v648
        %v650 = vsub.f32 1.0, %v649
        %v651 = vmul.f32 %v648, %v650
        %v652 = vadd.f32 %v648, %v651
        %vm653 = vweird.f32 %v422
        %vm654 = vweird.f32 %v648
        %vm655 = vmor %vm653, %vm654
        %v656 = vsel %vm655, %v648, %v652
        %v657 = vand.u32 2147483647, %v422
        %vm658 = vcmp.eq.f32.partialorder %v657, 8.507059e+37
        %v659 = vand.u32 %v422, 2147483648
        %v660 = vor.u32 1.1754944e-38, %v659
        %v661 = vsel %vm658, %v660, %v656
        %v662 = vmul.f32 1.0, %v661
        %v663 = vpack.c.bf16 %v437, %v437
        %v664 = vpack.c.bf16 %v452, %v452
        %v665 = vpack.c.bf16 %v467, %v467
        %v666 = vpack.c.bf16 %v482, %v482
        %v667 = vpack.c.bf16 %v497, %v497
        %v668 = vpack.c.bf16 %v512, %v512
        %v669 = vpack.c.bf16 %v527, %v527
        %v670 = vpack.c.bf16 %v542, %v542
        %v671 = vpack.c.bf16 %v557, %v557
        %v672 = vpack.c.bf16 %v572, %v572
        %v673 = vpack.c.bf16 %v587, %v587
        %v674 = vpack.c.bf16 %v602, %v602
        %v675 = vpack.c.bf16 %v617, %v617
        %v676 = vpack.c.bf16 %v632, %v632
        %v677 = vpack.c.bf16 %v647, %v647
        %v678 = vpack.c.bf16 %v662, %v662
        %679 = vst [vmem:[%s132] sm:$0xf] %v663
        %680 = vst [vmem:[%s132 + $0x4] sm:$0xf] %v664
        %681 = vst [vmem:[%s132 + $0x8] sm:$0xf] %v665
        %682 = vst [vmem:[%s132 + $0xc] sm:$0xf] %v666
        %683 = vst [vmem:[%s132 + $0x10] sm:$0xf] %v667
        %684 = vst [vmem:[%s132 + $0x14] sm:$0xf] %v668
        %685 = vst [vmem:[%s132 + $0x18] sm:$0xf] %v669
        %686 = vst [vmem:[%s132 + $0x1c] sm:$0xf] %v670
        %687 = vst [vmem:[%s132 + $0x20] sm:$0xf] %v671
        %688 = vst [vmem:[%s132 + $0x24] sm:$0xf] %v672
        %689 = vst [vmem:[%s132 + $0x28] sm:$0xf] %v673
        %690 = vst [vmem:[%s132 + $0x2c] sm:$0xf] %v674
        %691 = vst [vmem:[%s132 + $0x30] sm:$0xf] %v675
        %692 = vst [vmem:[%s132 + $0x34] sm:$0xf] %v676
        %693 = vst [vmem:[%s132 + $0x38] sm:$0xf] %v677
        %694 = vst [vmem:[%s132 + $0x3c] sm:$0xf] %v678
        %s695 = sand.u32 %s72, 1
        %s696 = scalar_lea.sflag [#allocation3], %s695
        %s697 = sand.u32 %s72, 1
        %s698 = smul.addr %s697, 64
        %s699 = scalar_lea.vmem [#allocation2], %s698
        // Predicated region
        $region25: #{tpu_custom_call.1} parent=23 // pred_check
          %p700 = pneg %p82
        $region26: #{tpu_custom_call.1} parent=23 // pred_check_branch
          %702 = sbr.rel (%p700) target = $region28
        $region27: #{tpu_custom_call.1} parent=23 // pred_region
          %s703 = smul.u32 16, %s21
          %705 = vsyncadd %s696, 0
          %s706 = sadd.s32 %s22, %s703
          %s707 = smul.addr %s20, 16
          %s708 = sadd.s32 %s706, %s707
          %s709 = smul.addr %s708, 4
          %s710 = scalar_lea.hbm %s1, %s709
          %s711 = sshll.u32 %s699, 4
          %s712 = int_to_ptr.vmem [resolvable:$true] %s711
          %s713 = sshll.u32 %s710, 4
          %s714 = int_to_ptr.hbm [resolvable:$true] %s713
          %719 = dma.vmem_to_hbm [thread:$0]  %s712, 1024, %s714, %s696, 64, 64, 4
        $region28: #{tpu_custom_call.1} parent=23 // pred_fallthru
          _
      $region24: #{tpu_custom_call.1} parent=5 // pred_fallthru
        _
      %p720 = scmp.le.s32.totalorder 2, %s10
      // Predicated region
      $region29: #{tpu_custom_call.1} parent=5 // pred_check
        %p721 = pneg %p720
      $region30: #{tpu_custom_call.1} parent=5 // pred_check_branch
        %723 = sbr.rel (%p721) target = $region32
      $region31: #{tpu_custom_call.1} parent=5 // pred_region
        %s724 = ssub.s32 %s10, 2
        // Predicated region
        $region33: #{tpu_custom_call.1} parent=31 // pred_check
          %p725 = pneg %p88
        $region34: #{tpu_custom_call.1} parent=31 // pred_check_branch
          %727 = sbr.rel (%p725) target = $region36
        $region35: #{tpu_custom_call.1} parent=31 // pred_region
          %s728 = sand.u32 %s73, 1
          %s729 = scalar_lea.sflag [#allocation3], %s728
          %s730 = sand.u32 %s73, 1
          %s731 = smul.addr %s730, 64
          %s732 = scalar_lea.vmem [#allocation2], %s731
          %734 = dma.done %s729, 1024
        $region36: #{tpu_custom_call.1} parent=31 // pred_fallthru
          _
      $region32: #{tpu_custom_call.1} parent=5 // pred_fallthru
        _
    $region6: #{tpu_custom_call.1} parent=1 // loop_footer
      %s14 = sadd.s32 1, %s10
    $region7: #{tpu_custom_call.1} parent=1 // loop_footer_branch
      %9 = sbr.rel target = $region3
    $region8: #{tpu_custom_call.1} parent=1 // loop_exit
      _
    %735 = vsyncpa [#allocation3], 1
    %s736 = scalar_lea.sflag [#allocation3], 1
    %737 = vsyncpa %s736, 1

</llo_original>
